<compile_context>
chip_gen: v5e
topology: v5e:2x2
jax: 0.10.0
libtpu: 0.0.40
codegen_flags: <defaults>
</compile_context>

<pallas_src>
import functools

import jax
import jax.numpy as jnp
from jax.experimental import pallas as pl
from jax.experimental.pallas import tpu as pltpu


def _round_up(n, m):
    return ((n + m - 1) // m) * m


def mlp_kernel(x_ref, w1_ref, b1_ref, w2_ref, b2_ref, w3_ref, b3_ref, o_ref):
    # One batch tile per grid step: three fused MXU matmuls, f32 accumulate,
    # f32 bias-add + ReLU on the VPU, bf16 re-cast between layers for the MXU.
    cd = w1_ref.dtype                                   # compute dtype (bf16)
    x = x_ref[...].astype(cd)                           # (TILE_N, in)  f32 -> bf16 in-kernel

    h1 = jnp.dot(x, w1_ref[...], preferred_element_type=jnp.float32) + b1_ref[...]
    h1 = jnp.maximum(h1, 0.0).astype(cd)                # (TILE_N, hid)

    h2 = jnp.dot(h1, w2_ref[...], preferred_element_type=jnp.float32) + b2_ref[...]
    h2 = jnp.maximum(h2, 0.0).astype(cd)                # (TILE_N, hid)

    h3 = jnp.dot(h2, w3_ref[...], preferred_element_type=jnp.float32) + b3_ref[...]
    o_ref[...] = jnp.maximum(h3, 0.0).astype(o_ref.dtype)   # (TILE_N, out)


@functools.partial(jax.jit, static_argnames=("tile_n_cap", "compute_dtype"))
def mlp_forward(x, params, *, tile_n_cap=1024, compute_dtype=jnp.bfloat16):
    """x: [N, input_dim] float32. params: (in,out)-layout f32 weights + (1,out) f32 biases."""
    w1, b1 = params["w1"], params["b1"]
    w2, b2 = params["w2"], params["b2"]
    w3, b3 = params["w3"], params["b3"]

    N, in_dim = x.shape
    hid_dim = w1.shape[1]
    out_dim = w3.shape[1]

    # Batch tile: multiple of 8 sublanes, capped; pad batch up to a whole
    # number of tiles (padded rows are discarded by the final slice).
    tile_n = min(tile_n_cap, _round_up(max(N, 1), 8))
    n_pad = _round_up(N, tile_n)
    grid = (n_pad // tile_n,)

    xp = x if n_pad == N else jnp.pad(x, ((0, n_pad - N), (0, 0)))

    # Weights -> bf16 once (tiny arrays); biases stay f32 for the VPU add.
    w1c = w1.astype(compute_dtype)
    w2c = w2.astype(compute_dtype)
    w3c = w3.astype(compute_dtype)
    b1f = b1.astype(jnp.float32)
    b2f = b2.astype(jnp.float32)
    b3f = b3.astype(jnp.float32)

    # Whole-array, VMEM-resident blocks (constant index map -> DMA'd once).
    resident = lambda shape: pl.BlockSpec(shape, lambda i: (0, 0))

    out_padded = pl.pallas_call(
        mlp_kernel,
        out_shape=jax.ShapeDtypeStruct((n_pad, out_dim), jnp.float32),
        grid_spec=pltpu.PrefetchScalarGridSpec(
            num_scalar_prefetch=0,
            grid=grid,
            in_specs=[
                pl.BlockSpec((tile_n, in_dim), lambda i: (i, 0)),  # x moves with grid
                resident((in_dim, hid_dim)), resident((1, hid_dim)),   # fc1
                resident((hid_dim, hid_dim)), resident((1, hid_dim)),  # fc2
                resident((hid_dim, out_dim)), resident((1, out_dim)),  # fc3
            ],
            out_specs=pl.BlockSpec((tile_n, out_dim), lambda i: (i, 0)),
        ),
        compiler_params=pltpu.CompilerParams(
            dimension_semantics=("parallel",),   # batch tiles independent (2 TCs on v7x)
        ),
    )(xp, w1c, b1f, w2c, b2f, w3c, b3f)

    return out_padded[:N]


def init_params(key, input_dim, hidden_dim, output_dim):
    """Deterministic init mimicking nn.Linear default (uniform +/- 1/sqrt(fan_in)).
    Weights stored as [in_features, out_features] (transpose of PyTorch layout)."""
    ks = jax.random.split(key, 6)

    def linear(kw, kb, fan_in, fan_out):
        bound = 1.0 / jnp.sqrt(fan_in)
        w = jax.random.uniform(kw, (fan_in, fan_out), jnp.float32, -bound, bound)
        b = jax.random.uniform(kb, (1, fan_out), jnp.float32, -bound, bound)
        return w, b

    w1, b1 = linear(ks[0], ks[1], input_dim, hidden_dim)
    w2, b2 = linear(ks[2], ks[3], hidden_dim, hidden_dim)
    w3, b3 = linear(ks[4], ks[5], hidden_dim, output_dim)
    return {"w1": w1, "b1": b1, "w2": w2, "b2": b2, "w3": w3, "b3": b3}


def mlp_reference(x, p, compute_dtype=jnp.bfloat16):
    """Pure-JAX reference mirroring the kernel's dtype strategy
    (bf16 matmul inputs, f32 accumulate / bias / ReLU)."""
    def layer(h, w, b):
        y = jnp.dot(h.astype(compute_dtype), w.astype(compute_dtype),
                    preferred_element_type=jnp.float32) + b
        return jnp.maximum(y, 0.0)

    h = layer(x, p["w1"], p["b1"])
    h = layer(h, p["w2"], p["b2"])
    return layer(h, p["w3"], p["b3"])


if __name__ == "__main__":
    key = jax.random.PRNGKey(0)
    k_x, k_p, k_x2 = jax.random.split(key, 3)

    batch, input_dim, hidden_dim, output_dim = 8, 16, 32, 8
    x = jax.random.normal(k_x, (batch, input_dim), jnp.float32)
    params = init_params(k_p, input_dim, hidden_dim, output_dim)

    # Small single-tile case.
    out = jax.block_until_ready(mlp_forward(x, params))
    ref = mlp_reference(x, params)
    assert out.shape == (batch, output_dim)
    assert jnp.allclose(out, ref, atol=2e-3, rtol=2e-3), "mismatch vs JAX reference (small)"

    # Multi-tile case (exercises batch tiling + remainder padding + parallel grid).
    batch2 = 20
    x2 = jax.random.normal(k_x2, (batch2, input_dim), jnp.float32)
    out2 = jax.block_until_ready(mlp_forward(x2, params, tile_n_cap=8))
    ref2 = mlp_reference(x2, params)
    assert out2.shape == (batch2, output_dim)
    assert jnp.allclose(out2, ref2, atol=2e-3, rtol=2e-3), "mismatch vs JAX reference (tiled)"

    print("KERNEL_OK")
</pallas_src>

<mosaic_0001>
module attributes {stable_mosaic.version = 11 : i64} {
  func.func @mlp_kernel(%arg0: i32, %arg1: memref<8x16xf32, #tpu.memory_space<vmem>>, %arg2: memref<16x32xbf16, #tpu.memory_space<vmem>>, %arg3: memref<1x32xf32, #tpu.memory_space<vmem>>, %arg4: memref<32x32xbf16, #tpu.memory_space<vmem>>, %arg5: memref<1x32xf32, #tpu.memory_space<vmem>>, %arg6: memref<32x8xbf16, #tpu.memory_space<vmem>>, %arg7: memref<1x8xf32, #tpu.memory_space<vmem>>, %arg8: memref<8x8xf32, #tpu.memory_space<vmem>>) attributes {dimension_semantics = [#tpu.dimension_semantics<parallel>], iteration_bounds = array<i64: 1>, scalar_prefetch = 0 : i64, scratch_operands = 0 : i64, tpu.core_type = #tpu.core_type<tc>, window_params = [{transform_indices = @transform_0, window_bounds = array<i64: 8, 16>}, {pipeline_mode = #tpu.pipeline_mode<synchronous>, transform_indices = @transform_1, window_bounds = array<i64: 16, 32>}, {pipeline_mode = #tpu.pipeline_mode<synchronous>, transform_indices = @transform_2, window_bounds = array<i64: 1, 32>}, {pipeline_mode = #tpu.pipeline_mode<synchronous>, transform_indices = @transform_3, window_bounds = array<i64: 32, 32>}, {pipeline_mode = #tpu.pipeline_mode<synchronous>, transform_indices = @transform_4, window_bounds = array<i64: 1, 32>}, {pipeline_mode = #tpu.pipeline_mode<synchronous>, transform_indices = @transform_5, window_bounds = array<i64: 32, 8>}, {pipeline_mode = #tpu.pipeline_mode<synchronous>, transform_indices = @transform_6, window_bounds = array<i64: 1, 8>}, {transform_indices = @transform_7, window_bounds = array<i64: 8, 8>}]} {
    %c0 = arith.constant 0 : index
    %c0_0 = arith.constant 0 : index
    %0 = vector.load %arg1[%c0, %c0_0] : memref<8x16xf32, #tpu.memory_space<vmem>>, vector<8x16xf32>
    %1 = arith.truncf %0 : vector<8x16xf32> to vector<8x16xbf16>
    %c0_1 = arith.constant 0 : index
    %c0_2 = arith.constant 0 : index
    %2 = vector.load %arg2[%c0_1, %c0_2] : memref<16x32xbf16, #tpu.memory_space<vmem>>, vector<16x32xbf16>
    %cst = arith.constant dense<0.000000e+00> : vector<8x32xf32>
    %3 = tpu.matmul %1, %2, %cst {dimension_numbers = #tpu.dot_dimension_numbers<[1], [0], [0], [1], [0, 0, 1, 1], [], []>} : vector<8x16xbf16>, vector<16x32xbf16>, vector<8x32xf32> -> vector<8x32xf32>
    %c0_3 = arith.constant 0 : index
    %c0_4 = arith.constant 0 : index
    %4 = vector.load %arg3[%c0_3, %c0_4] : memref<1x32xf32, #tpu.memory_space<vmem>>, vector<1x32xf32>
    %5 = vector.broadcast %4 : vector<1x32xf32> to vector<8x32xf32>
    %6 = arith.addf %3, %5 : vector<8x32xf32>
    %cst_5 = arith.constant 0.000000e+00 : f32
    %7 = vector.broadcast %cst_5 : f32 to vector<8x32xf32>
    %8 = arith.maximumf %6, %7 : vector<8x32xf32>
    %9 = arith.truncf %8 : vector<8x32xf32> to vector<8x32xbf16>
    %c0_6 = arith.constant 0 : index
    %c0_7 = arith.constant 0 : index
    %10 = vector.load %arg4[%c0_6, %c0_7] : memref<32x32xbf16, #tpu.memory_space<vmem>>, vector<32x32xbf16>
    %cst_8 = arith.constant dense<0.000000e+00> : vector<8x32xf32>
    %11 = tpu.matmul %9, %10, %cst_8 {dimension_numbers = #tpu.dot_dimension_numbers<[1], [0], [0], [1], [0, 0, 1, 1], [], []>} : vector<8x32xbf16>, vector<32x32xbf16>, vector<8x32xf32> -> vector<8x32xf32>
    %c0_9 = arith.constant 0 : index
    %c0_10 = arith.constant 0 : index
    %12 = vector.load %arg5[%c0_9, %c0_10] : memref<1x32xf32, #tpu.memory_space<vmem>>, vector<1x32xf32>
    %13 = vector.broadcast %12 : vector<1x32xf32> to vector<8x32xf32>
    %14 = arith.addf %11, %13 : vector<8x32xf32>
    %cst_11 = arith.constant 0.000000e+00 : f32
    %15 = vector.broadcast %cst_11 : f32 to vector<8x32xf32>
    %16 = arith.maximumf %14, %15 : vector<8x32xf32>
    %17 = arith.truncf %16 : vector<8x32xf32> to vector<8x32xbf16>
    %c0_12 = arith.constant 0 : index
    %c0_13 = arith.constant 0 : index
    %18 = vector.load %arg6[%c0_12, %c0_13] : memref<32x8xbf16, #tpu.memory_space<vmem>>, vector<32x8xbf16>
    %cst_14 = arith.constant dense<0.000000e+00> : vector<8x8xf32>
    %19 = tpu.matmul %17, %18, %cst_14 {dimension_numbers = #tpu.dot_dimension_numbers<[1], [0], [0], [1], [0, 0, 1, 1], [], []>} : vector<8x32xbf16>, vector<32x8xbf16>, vector<8x8xf32> -> vector<8x8xf32>
    %c0_15 = arith.constant 0 : index
    %c0_16 = arith.constant 0 : index
    %20 = vector.load %arg7[%c0_15, %c0_16] : memref<1x8xf32, #tpu.memory_space<vmem>>, vector<1x8xf32>
    %21 = vector.broadcast %20 : vector<1x8xf32> to vector<8x8xf32>
    %22 = arith.addf %19, %21 : vector<8x8xf32>
    %cst_17 = arith.constant 0.000000e+00 : f32
    %23 = vector.broadcast %cst_17 : f32 to vector<8x8xf32>
    %24 = arith.maximumf %22, %23 : vector<8x8xf32>
    %c0_18 = arith.constant 0 : index
    %c0_19 = arith.constant 0 : index
    %25 = vector.load %arg8[%c0_18, %c0_19] : memref<8x8xf32, #tpu.memory_space<vmem>>, vector<8x8xf32>
    tpu.vector_store %arg8[%c0_18, %c0_19], %24 {strides = array<i32>} : memref<8x8xf32, #tpu.memory_space<vmem>>, vector<8x8xf32>,
    return
  }
  func.func @transform_0(%arg0: i32) -> (i32, i32) {
    %c0_i32 = arith.constant 0 : i32
    %c0_i32_0 = arith.constant 0 : i32
    return %arg0, %c0_i32 : i32, i32
  }
  func.func @transform_1(%arg0: i32) -> (i32, i32) {
    %c0_i32 = arith.constant 0 : i32
    %c0_i32_0 = arith.constant 0 : i32
    %c0_i32_1 = arith.constant 0 : i32
    return %c0_i32, %c0_i32_0 : i32, i32
  }
  func.func @transform_2(%arg0: i32) -> (i32, i32) {
    %c0_i32 = arith.constant 0 : i32
    %c0_i32_0 = arith.constant 0 : i32
    %c0_i32_1 = arith.constant 0 : i32
    return %c0_i32, %c0_i32_0 : i32, i32
  }
  func.func @transform_3(%arg0: i32) -> (i32, i32) {
    %c0_i32 = arith.constant 0 : i32
    %c0_i32_0 = arith.constant 0 : i32
    %c0_i32_1 = arith.constant 0 : i32
    return %c0_i32, %c0_i32_0 : i32, i32
  }
  func.func @transform_4(%arg0: i32) -> (i32, i32) {
    %c0_i32 = arith.constant 0 : i32
    %c0_i32_0 = arith.constant 0 : i32
    %c0_i32_1 = arith.constant 0 : i32
    return %c0_i32, %c0_i32_0 : i32, i32
  }
  func.func @transform_5(%arg0: i32) -> (i32, i32) {
    %c0_i32 = arith.constant 0 : i32
    %c0_i32_0 = arith.constant 0 : i32
    %c0_i32_1 = arith.constant 0 : i32
    return %c0_i32, %c0_i32_0 : i32, i32
  }
  func.func @transform_6(%arg0: i32) -> (i32, i32) {
    %c0_i32 = arith.constant 0 : i32
    %c0_i32_0 = arith.constant 0 : i32
    %c0_i32_1 = arith.constant 0 : i32
    return %c0_i32, %c0_i32_0 : i32, i32
  }
  func.func @transform_7(%arg0: i32) -> (i32, i32) {
    %c0_i32 = arith.constant 0 : i32
    %c0_i32_0 = arith.constant 0 : i32
    return %arg0, %c0_i32 : i32, i32
  }
}

</mosaic_0001>

<llo_original>
// kernel: mlp_forward.1
$region0: #{mlp_forward.1}
  #allocation0 [shape = 'u32[]', space=smem, size = 0x4, offset = 0x4, fixed_abs, tag = 'smem constant byte address 0x4 - core index']
  #allocation1 [shape = 'u32[72,128]{1,0:T(1,128)}', space=vmem, size = 0x9000, scoped, tag = 'internal scratch']
  %s0 = inlined_call_operand.vmem [shape: f32[8,16], index: 0, kind: input, shape index: {}]
  %s1 = inlined_call_operand.vmem [shape: bf16[16,32], index: 1, kind: input, shape index: {}]
  %s2 = inlined_call_operand.vmem [shape: f32[1,32], index: 2, kind: input, shape index: {}]
  %s3 = inlined_call_operand.vmem [shape: bf16[32,32], index: 3, kind: input, shape index: {}]
  %s4 = inlined_call_operand.vmem [shape: f32[1,32], index: 4, kind: input, shape index: {}]
  %s5 = inlined_call_operand.vmem [shape: bf16[32,8], index: 5, kind: input, shape index: {}]
  %s6 = inlined_call_operand.vmem [shape: f32[1,8], index: 6, kind: input, shape index: {}]
  %s7 = inlined_call_operand.hbm [shape: f32[8,8], index: 7, kind: output, shape index: {}]
  %s8 = sld [smem:[#allocation0]]
  $region38: #{mlp_forward.1} parent=0
    _
  %s10 = ssub.s32 1, %s8
  %s11 = scalar_select 0, %s10, %s8
  $region1: #{mlp_forward.1} parent=0
    #allocation2 [shape = 'u8[4096]{0}', space=vmem, size = 0x1000, scoped, tag = 'output window, operand 0, single buffered']
    #allocation3 [shape = 's32[1]{0}', space=sflag, size = 0x4, scoped, tag = 'scoped memory for mlp_forward.1']
    %12 = vsyncpa [#allocation3], 0
    // Predicated region
    $region2: #{mlp_forward.1} parent=1 // pred_check
      _
    $region3: #{mlp_forward.1} parent=1 // pred_check_branch
      %14 = sbr.rel (0) target = $region5
    $region4: #{mlp_forward.1} parent=1 // pred_region
      _
    $region5: #{mlp_forward.1} parent=1 // pred_fallthru
      _
    // Predicated region
    $region6: #{mlp_forward.1} parent=1 // pred_check
      _
    $region7: #{mlp_forward.1} parent=1 // pred_check_branch
      %16 = sbr.rel (0) target = $region9
    $region8: #{mlp_forward.1} parent=1 // pred_region
      _
    $region9: #{mlp_forward.1} parent=1 // pred_fallthru
      _
    // Predicated region
    $region10: #{mlp_forward.1} parent=1 // pred_check
      _
    $region11: #{mlp_forward.1} parent=1 // pred_check_branch
      %18 = sbr.rel (0) target = $region13
    $region12: #{mlp_forward.1} parent=1 // pred_region
      _
    $region13: #{mlp_forward.1} parent=1 // pred_fallthru
      _
    // Predicated region
    $region14: #{mlp_forward.1} parent=1 // pred_check
      _
    $region15: #{mlp_forward.1} parent=1 // pred_check_branch
      %20 = sbr.rel (0) target = $region17
    $region16: #{mlp_forward.1} parent=1 // pred_region
      _
    $region17: #{mlp_forward.1} parent=1 // pred_fallthru
      _
    // Predicated region
    $region18: #{mlp_forward.1} parent=1 // pred_check
      _
    $region19: #{mlp_forward.1} parent=1 // pred_check_branch
      %22 = sbr.rel (0) target = $region21
    $region20: #{mlp_forward.1} parent=1 // pred_region
      _
    $region21: #{mlp_forward.1} parent=1 // pred_fallthru
      _
    // Predicated region
    $region22: #{mlp_forward.1} parent=1 // pred_check
      _
    $region23: #{mlp_forward.1} parent=1 // pred_check_branch
      %24 = sbr.rel (0) target = $region25
    $region24: #{mlp_forward.1} parent=1 // pred_region
      _
    $region25: #{mlp_forward.1} parent=1 // pred_fallthru
      _
    // Predicated region
    $region26: #{mlp_forward.1} parent=1 // pred_check
      _
    $region27: #{mlp_forward.1} parent=1 // pred_check_branch
      %26 = sbr.rel (0) target = $region29
    $region28: #{mlp_forward.1} parent=1 // pred_region
      _
    $region29: #{mlp_forward.1} parent=1 // pred_fallthru
      _
    %v28 = vld [vmem:[%s0] sm:$0xff]
    %v29 = vpack.c.bf16 %v28, %v28
    %v30 = vld [vmem:[%s1] sm:$0xf]
    %v31 = vld [vmem:[%s1 + $0x4] sm:$0xf]
    %v32 = vld [vmem:[%s2] sm:$0x1]
    %v34 = vperm.slane %v32, 0
    %v38 = vunpack.c.l.b16 %v30
    %v39 = vunpack.c.l.b16 %v31
    %v40 = vpack.c.b16 %v39, %v38
    %vm42 = vcmask 130048
    %v44 = vsel %vm42, %v29, 0
    %46 = vmatpush.bf16.msra.mxu0 0
    %47 = vmatpush.bf16.msra.mxu0 0
    %48 = vmatpush.bf16.msra.mxu0 0
    %49 = vmatpush.bf16.msra.mxu0 0
    %50 = vmatpush.bf16.msra.mxu0 0
    %51 = vmatpush.bf16.msra.mxu0 0
    %52 = vmatpush.bf16.msra.mxu0 0
    %53 = vmatpush.bf16.msra.mxu0 %v40
    %54 = vmatmul.bf16.gmra.mxu0 %v44
    %v55 = vpop.f32.mrf.mxu0
    %v56 = vadd.f32 %v34, %v55
    %v57 = vpop.f32.mrf.mxu0
    %58 = vdwg.mxu0
    %v59 = vmax.f32 %v56, 0.0
    %v60 = vpack.c.bf16 %v59, %v59
    %v61 = vld [vmem:[%s3] sm:$0xf]
    %v62 = vld [vmem:[%s3 + $0x4] sm:$0xf]
    %v63 = vld [vmem:[%s3 + $0x8] sm:$0xf]
    %v64 = vld [vmem:[%s3 + $0xc] sm:$0xf]
    %v65 = vld [vmem:[%s4] sm:$0x1]
    %v67 = vperm.slane %v65, 0
    %v73 = vunpack.c.l.b16 %v61
    %v74 = vunpack.c.l.b16 %v62
    %v75 = vunpack.c.l.b16 %v63
    %v76 = vunpack.c.l.b16 %v64
    %v77 = vpack.c.b16 %v74, %v73
    %v78 = vpack.c.b16 %v76, %v75
    %vm81 = vcmask 261120
    %v83 = vsel %vm81, %v60, 0
    %85 = vmatpush.bf16.msra.mxu0 0
    %86 = vmatpush.bf16.msra.mxu0 0
    %87 = vmatpush.bf16.msra.mxu0 0
    %88 = vmatpush.bf16.msra.mxu0 0
    %89 = vmatpush.bf16.msra.mxu0 0
    %90 = vmatpush.bf16.msra.mxu0 0
    %91 = vmatpush.bf16.msra.mxu0 %v78
    %92 = vmatpush.bf16.msra.mxu0 %v77
    %93 = vmatmul.bf16.gmra.mxu0 %v83
    %v94 = vpop.f32.mrf.mxu0
    %v95 = vadd.f32 %v67, %v94
    %v96 = vpop.f32.mrf.mxu0
    %97 = vdwg.mxu0
    %v98 = vmax.f32 %v95, 0.0
    %v99 = vpack.c.bf16 %v98, %v98
    %v100 = vld [vmem:[%s5] sm:$0xf]
    %v101 = vld [vmem:[%s5 + $0x4] sm:$0xf]
    %v102 = vld [vmem:[%s5 + $0x8] sm:$0xf]
    %v103 = vld [vmem:[%s5 + $0xc] sm:$0xf]
    %v104 = vld [vmem:[%s6] sm:$0x1]
    %v106 = vperm.slane %v104, 0
    %v112 = vunpack.c.l.b16 %v100
    %v113 = vunpack.c.l.b16 %v101
    %v114 = vunpack.c.l.b16 %v102
    %v115 = vunpack.c.l.b16 %v103
    %v116 = vpack.c.b16 %v113, %v112
    %v117 = vpack.c.b16 %v115, %v114
    %v121 = vsel %vm81, %v99, 0
    %123 = vmatpush.bf16.msra.mxu0 0
    %124 = vmatpush.bf16.msra.mxu0 0
    %125 = vmatpush.bf16.msra.mxu0 0
    %126 = vmatpush.bf16.msra.mxu0 0
    %127 = vmatpush.bf16.msra.mxu0 0
    %128 = vmatpush.bf16.msra.mxu0 0
    %129 = vmatpush.bf16.msra.mxu0 %v117
    %130 = vmatpush.bf16.msra.mxu0 %v116
    %131 = vmatmul.bf16.gmra.mxu0 %v121
    %v132 = vpop.f32.mrf.mxu0
    %v133 = vadd.f32 %v106, %v132
    %v134 = vpop.f32.mrf.mxu0
    %135 = vdwg.mxu0
    %v136 = vmax.f32 %v133, 0.0
    %vm137 = vcmask 64512
    %138 = vst.msk [vmem:[#allocation2] sm:$0xff] %vm137, %v136
    // Predicated region
    $region30: #{mlp_forward.1} parent=1 // pred_check
      _
    $region31: #{mlp_forward.1} parent=1 // pred_check_branch
      %140 = sbr.rel (0) target = $region33
    $region32: #{mlp_forward.1} parent=1 // pred_region
      %142 = vsyncadd [#allocation3], 0
      %s144 = sshll.u32 [#allocation2], 4
      %s145 = int_to_ptr.vmem [resolvable:$true] %s144
      %s146 = sshll.u32 %s7, 4
      %s147 = int_to_ptr.hbm [resolvable:$true] %s146
      %149 = dma.vmem_to_hbm [thread:$0]  %s145, 128, %s147, [#allocation3]
    $region33: #{mlp_forward.1} parent=1 // pred_fallthru
      _
    // Predicated region
    $region34: #{mlp_forward.1} parent=1 // pred_check
      _
    $region35: #{mlp_forward.1} parent=1 // pred_check_branch
      %151 = sbr.rel (0) target = $region37
    $region36: #{mlp_forward.1} parent=1 // pred_region
      %153 = dma.done [#allocation3], 128
    $region37: #{mlp_forward.1} parent=1 // pred_fallthru
      _
    %154 = vsyncpa [#allocation3], 1

</llo_original>
